<compile_context>
chip_gen: v7x
topology: tpu7x:2x2x1
jax: 0.10.0
libtpu: 0.0.40
codegen_flags: <defaults>
</compile_context>

<pallas_src>
import functools

import jax
import jax.numpy as jnp
from jax.experimental import pallas as pl
from jax.experimental.pallas import tpu as pltpu

_LANE = 128


def _vmem_capacity_bytes():
    """Physical VMEM per core; conservative default if the query is unavailable."""
    try:
        info = pltpu.get_tpu_info()
        cap = getattr(info, "vmem_capacity_bytes", None)
        if cap:
            return int(cap)
    except Exception:
        pass
    return 64 * 1024 * 1024  # v7x-sized fallback (safe lower bound)


def _budgets():
    cap = _vmem_capacity_bytes()
    # 96 MiB scoped limit on 128-MiB chips (v5e/v6e), 48 MiB on v7x (64 MiB VMEM).
    vmem_limit = min((cap * 3) // 4, 96 * 1024 * 1024)
    tile_budget = vmem_limit // 8  # in + out tiles, double-buffered, plus headroom
    return vmem_limit, tile_budget


def _sublane_pack(dtype_bytes):
    # elements per packed sublane group: 8 f32 / 16 bf16 / 32 int8
    return 8 * max(1, 4 // dtype_bytes)


def _pick_hw_tile(hw, max_elems, override=None):
    """Largest lane-dense (multiple-of-128) HW tile within `max_elems` elements.

    Prefers a tile that divides HW exactly (keeps every block's stores dense) as
    long as that does not shrink the tile below half the budget."""
    if override is not None:
        if override >= hw:
            return hw
        return max(_LANE, (override // _LANE) * _LANE)
    max_t = max(_LANE, (max_elems // _LANE) * _LANE)
    if hw <= max_t:
        return hw                      # full-extent last dim is always a legal block dim
    t = max_t
    lo = max(_LANE, max_t // 2)
    while t >= lo:
        if hw % t == 0:
            return t                   # dense: no masked tail block
        t -= _LANE
    return max_t                       # ragged tail (masked reads / dropped writes)


# --------------------------- kernels ---------------------------

def _fused_kernel(x_ref, w1_ref, b1_ref, w2_ref, b2_ref, o_ref, *, inv_hw):
    # x_ref/o_ref: (1, C, HW).  Weights in PyTorch layout; the excite MLP is applied
    # to the pooled column vector so no transposes are needed in-kernel.
    x = x_ref[...]                                                       # (1, C, HW)
    pooled = jnp.sum(x.astype(jnp.float32), axis=-1, keepdims=True)[0] * inv_hw  # (C, 1)
    h = jnp.dot(w1_ref[...], pooled, preferred_element_type=jnp.float32) + b1_ref[...]
    h = jnp.maximum(h, 0.0)                                              # (inner, 1)
    s = jnp.dot(w2_ref[...], h, preferred_element_type=jnp.float32) + b2_ref[...]
    s = jax.nn.sigmoid(s).astype(o_ref.dtype)                            # (C, 1)
    o_ref[...] = x * s[None]                                             # channel rescale


def _pool_excite_kernel(x_ref, w1_ref, b1_ref, w2_ref, b2_ref, s_ref, acc_ref,
                        *, hw, masked):
    # x_ref: (1, C, T) tile; acc_ref: (C, 1) f32 scratch, live across the t grid axis.
    t = pl.program_id(1)

    @pl.when(t == 0)
    def _():
        acc_ref[...] = jnp.zeros_like(acc_ref)

    x = x_ref[...]
    tile = x.shape[-1]
    xf = x.astype(jnp.float32)
    if masked:
        # Cheap (1, 1, T) column-index mask; broadcasts over C (no full-tile iota).
        col = t * tile + jax.lax.broadcasted_iota(jnp.int32, (1, 1, tile), 2)
        xf = jnp.where(col < hw, xf, 0.0)
    acc_ref[...] += jnp.sum(xf, axis=-1, keepdims=True)[0]               # (C, 1)

    @pl.when(t == pl.num_programs(1) - 1)
    def _():
        pooled = acc_ref[...] * (1.0 / hw)                               # (C, 1) mean
        h = jnp.dot(w1_ref[...], pooled, preferred_element_type=jnp.float32) + b1_ref[...]
        h = jnp.maximum(h, 0.0)
        s = jnp.dot(w2_ref[...], h, preferred_element_type=jnp.float32) + b2_ref[...]
        s_ref[...] = jax.nn.sigmoid(s).astype(s_ref.dtype)[None]         # (1, C, 1)


def _scale_kernel(x_ref, s_ref, o_ref):
    # x_ref/o_ref: (R, T) row tiles of the (B*C, HW) view; s_ref: (R, 1) per-row scale.
    o_ref[...] = x_ref[...] * s_ref[...]


# --------------------------- wrapper ---------------------------

def self_attention_pallas(x, w1, b1, w2, b2, *, force_multipass=False, hw_tile=None):
    """Forward pass of SelfAttention (SE block).

    x: (B, C, H, W) NCHW.  w1: (inner, C), b1: (inner,), w2: (C, inner), b2: (C,)
    — PyTorch nn.Linear conventions."""
    B, C, H, W = x.shape
    inner = w1.shape[0]
    HW = H * W
    dtype_bytes = jnp.dtype(x.dtype).itemsize

    x_flat = x.reshape(B, C, HW)

    # Column-vector parameter layout so the tiny excite MLP runs per-batch in-kernel.
    w1f = w1.astype(jnp.float32)                    # (inner, C)
    w2f = w2.astype(jnp.float32)                    # (C, inner)
    b1c = b1.reshape(inner, 1).astype(jnp.float32)  # (inner, 1)
    b2c = b2.reshape(C, 1).astype(jnp.float32)      # (C, 1)

    vmem_limit, tile_budget = _budgets()
    pack = _sublane_pack(dtype_bytes)
    padded_c = -(-C // pack) * pack                 # sublane-padded channel count
    slab_vmem = padded_c * HW * dtype_bytes         # VMEM footprint of one (C, HW) block

    weight_specs = [
        pl.BlockSpec((inner, C), lambda *a: (0, 0)),
        pl.BlockSpec((inner, 1), lambda *a: (0, 0)),
        pl.BlockSpec((C, inner), lambda *a: (0, 0)),
        pl.BlockSpec((C, 1), lambda *a: (0, 0)),
    ]

    # ---------------- Fused single-pass path ----------------
    # in + out slabs, double-buffered (4x slab) must fit under the VMEM limit.
    if not force_multipass and 5 * slab_vmem <= vmem_limit:
        out_flat = pl.pallas_call(
            functools.partial(_fused_kernel, inv_hw=1.0 / HW),
            out_shape=jax.ShapeDtypeStruct((B, C, HW), x.dtype),
            grid=(B,),
            in_specs=[pl.BlockSpec((1, C, HW), lambda b: (b, 0, 0))] + weight_specs,
            out_specs=pl.BlockSpec((1, C, HW), lambda b: (b, 0, 0)),
            compiler_params=pltpu.CompilerParams(
                dimension_semantics=("parallel",),
                vmem_limit_bytes=vmem_limit),
            cost_estimate=pl.CostEstimate(
                flops=2 * B * C * HW + 4 * B * C * inner,
                transcendentals=B * C,
                bytes_accessed=2 * B * C * HW * dtype_bytes),
        )(x_flat, w1f, b1c, w2f, b2c)
        return out_flat.reshape(B, C, H, W)

    # ---------------- Multi-pass fallback (very large slabs) ----------------
    # Pass 1: tiled pool over HW, excite MLP fused into the t == nt-1 finalize.
    # TODO(synk): very large C (padded_c * 128 * itemsize > tile budget) would need a
    # C-tiling fallback; not implemented (unreachable at SE-block channel counts).
    max_elems = max(_LANE, tile_budget // max(1, padded_c * dtype_bytes))
    t_pool = _pick_hw_tile(HW, max_elems, override=hw_tile)
    n_t = pl.cdiv(HW, t_pool)
    masked = (HW % t_pool) != 0

    s = pl.pallas_call(
        functools.partial(_pool_excite_kernel, hw=HW, masked=masked),
        out_shape=jax.ShapeDtypeStruct((B, C, 1), x.dtype),
        grid=(B, n_t),
        in_specs=[pl.BlockSpec((1, C, t_pool), lambda b, t: (b, 0, t))] + weight_specs,
        out_specs=pl.BlockSpec((1, C, 1), lambda b, t: (b, 0, 0)),
        scratch_shapes=[pltpu.VMEM((C, 1), jnp.float32)],
        compiler_params=pltpu.CompilerParams(
            dimension_semantics=("parallel", "arbitrary"),
            vmem_limit_bytes=vmem_limit),
        cost_estimate=pl.CostEstimate(
            flops=B * C * HW + 4 * B * C * inner,
            transcendentals=B * C,
            bytes_accessed=B * C * HW * dtype_bytes + B * C * dtype_bytes),
    )(x_flat, w1f, b1c, w2f, b2c)

    # Pass 2: channel-wise rescale on a 2-D (B*C, HW) view (sublane/lane dense).
    rows = B * C
    x2 = x_flat.reshape(rows, HW)
    s2 = s.reshape(rows, 1)
    r_tile = rows if rows <= 256 else 256           # 256 is a multiple of every pack factor
    padded_r = -(-r_tile // pack) * pack
    max_elems2 = max(_LANE, tile_budget // max(1, padded_r * dtype_bytes))
    t_scale = _pick_hw_tile(HW, max_elems2, override=hw_tile)

    out2 = pl.pallas_call(
        _scale_kernel,
        out_shape=jax.ShapeDtypeStruct((rows, HW), x.dtype),
        grid=(pl.cdiv(rows, r_tile), pl.cdiv(HW, t_scale)),
        in_specs=[
            pl.BlockSpec((r_tile, t_scale), lambda r, t: (r, t)),
            pl.BlockSpec((r_tile, 1), lambda r, t: (r, 0)),
        ],
        out_specs=pl.BlockSpec((r_tile, t_scale), lambda r, t: (r, t)),
        compiler_params=pltpu.CompilerParams(
            dimension_semantics=("parallel", "parallel"),
            vmem_limit_bytes=vmem_limit),
        cost_estimate=pl.CostEstimate(
            flops=rows * HW,
            transcendentals=0,
            bytes_accessed=2 * rows * HW * dtype_bytes),
    )(x2, s2)
    return out2.reshape(B, C, H, W)


def _reference(x, w1, b1, w2, b2):
    pooled = jnp.mean(x, axis=(2, 3))                       # (B, C)
    h = jnp.maximum(pooled @ w1.T + b1, 0.0)                # (B, inner)
    s = jax.nn.sigmoid(h @ w2.T + b2)                       # (B, C)
    return x * s[:, :, None, None]


if __name__ == "__main__":
    B, C, H, W = 2, 4, 16, 16
    inner = 8

    key = jax.random.PRNGKey(0)
    kx, k1, k2, k3, k4, kx2 = jax.random.split(key, 6)

    x = jax.random.normal(kx, (B, C, H, W), dtype=jnp.float32)

    # Deterministic parameter init (uniform, nn.Linear-like scaling).
    bound1 = 1.0 / (C ** 0.5)
    w1 = jax.random.uniform(k1, (inner, C), jnp.float32, -bound1, bound1)
    b1 = jax.random.uniform(k2, (inner,), jnp.float32, -bound1, bound1)
    bound2 = 1.0 / (inner ** 0.5)
    w2 = jax.random.uniform(k3, (C, inner), jnp.float32, -bound2, bound2)
    b2 = jax.random.uniform(k4, (C,), jnp.float32, -bound2, bound2)

    # Fused single-pass path (small slab -> one kernel launch, x read once).
    out = jax.block_until_ready(self_attention_pallas(x, w1, b1, w2, b2))
    ref = _reference(x, w1, b1, w2, b2)
    assert out.shape == (B, C, H, W)
    assert jnp.allclose(out, ref, atol=1e-5, rtol=1e-5), "fused path mismatch"

    # Also exercise the multi-pass fallback with a ragged (non-multiple-of-128) HW.
    H2 = W2 = 20
    x2 = jax.random.normal(kx2, (B, C, H2, W2), dtype=jnp.float32)
    out2 = jax.block_until_ready(
        self_attention_pallas(x2, w1, b1, w2, b2, force_multipass=True, hw_tile=128))
    ref2 = _reference(x2, w1, b1, w2, b2)
    assert jnp.allclose(out2, ref2, atol=1e-5, rtol=1e-5), "multi-pass path mismatch"

    print("KERNEL_OK")
</pallas_src>

<mosaic_0001>
module attributes {stable_mosaic.version = 11 : i64} {
  func.func @_fused_kernel(%arg0: i32, %arg1: memref<1x4x256xf32, #tpu.memory_space<vmem>>, %arg2: memref<8x4xf32, #tpu.memory_space<vmem>>, %arg3: memref<8x1xf32, #tpu.memory_space<vmem>>, %arg4: memref<4x8xf32, #tpu.memory_space<vmem>>, %arg5: memref<4x1xf32, #tpu.memory_space<vmem>>, %arg6: memref<1x4x256xf32, #tpu.memory_space<vmem>>) attributes {dimension_semantics = [#tpu.dimension_semantics<parallel>], iteration_bounds = array<i64: 2>, scalar_prefetch = 0 : i64, scratch_operands = 0 : i64, tpu.core_type = #tpu.core_type<tc>, window_params = [{transform_indices = @transform_0, window_bounds = array<i64: 1, 4, 256>}, {pipeline_mode = #tpu.pipeline_mode<synchronous>, transform_indices = @transform_1, window_bounds = array<i64: 8, 4>}, {pipeline_mode = #tpu.pipeline_mode<synchronous>, transform_indices = @transform_2, window_bounds = array<i64: 8, 1>}, {pipeline_mode = #tpu.pipeline_mode<synchronous>, transform_indices = @transform_3, window_bounds = array<i64: 4, 8>}, {pipeline_mode = #tpu.pipeline_mode<synchronous>, transform_indices = @transform_4, window_bounds = array<i64: 4, 1>}, {transform_indices = @transform_5, window_bounds = array<i64: 1, 4, 256>}]} {
    %c0 = arith.constant 0 : index
    %c0_0 = arith.constant 0 : index
    %c0_1 = arith.constant 0 : index
    %0 = vector.load %arg1[%c0, %c0_0, %c0_1] : memref<1x4x256xf32, #tpu.memory_space<vmem>>, vector<1x4x256xf32>
    %cst = arith.constant dense<0.000000e+00> : vector<1x4xf32>
    %1 = vector.multi_reduction <add>, %0, %cst [2] : vector<1x4x256xf32> to vector<1x4xf32>
    %2 = vector.shape_cast %1 : vector<1x4xf32> to vector<1x4x1xf32>
    %3 = vector.shape_cast %2 : vector<1x4x1xf32> to vector<4x1xf32>
    %cst_2 = arith.constant 3.906250e-03 : f32
    %4 = vector.broadcast %cst_2 : f32 to vector<4x1xf32>
    %5 = arith.mulf %3, %4 : vector<4x1xf32>
    %c0_3 = arith.constant 0 : index
    %c0_4 = arith.constant 0 : index
    %6 = vector.load %arg2[%c0_3, %c0_4] : memref<8x4xf32, #tpu.memory_space<vmem>>, vector<8x4xf32>
    %cst_5 = arith.constant dense<0.000000e+00> : vector<8x1xf32>
    %7 = tpu.matmul %6, %5, %cst_5 {dimension_numbers = #tpu.dot_dimension_numbers<[1], [0], [0], [1], [0, 0, 1, 1], [], []>} : vector<8x4xf32>, vector<4x1xf32>, vector<8x1xf32> -> vector<8x1xf32>
    %c0_6 = arith.constant 0 : index
    %c0_7 = arith.constant 0 : index
    %8 = vector.load %arg3[%c0_6, %c0_7] : memref<8x1xf32, #tpu.memory_space<vmem>>, vector<8x1xf32>
    %9 = arith.addf %7, %8 : vector<8x1xf32>
    %cst_8 = arith.constant 0.000000e+00 : f32
    %10 = vector.broadcast %cst_8 : f32 to vector<8x1xf32>
    %11 = arith.maximumf %9, %10 : vector<8x1xf32>
    %c0_9 = arith.constant 0 : index
    %c0_10 = arith.constant 0 : index
    %12 = vector.load %arg4[%c0_9, %c0_10] : memref<4x8xf32, #tpu.memory_space<vmem>>, vector<4x8xf32>
    %cst_11 = arith.constant dense<0.000000e+00> : vector<4x1xf32>
    %13 = tpu.matmul %12, %11, %cst_11 {dimension_numbers = #tpu.dot_dimension_numbers<[1], [0], [0], [1], [0, 0, 1, 1], [], []>} : vector<4x8xf32>, vector<8x1xf32>, vector<4x1xf32> -> vector<4x1xf32>
    %c0_12 = arith.constant 0 : index
    %c0_13 = arith.constant 0 : index
    %14 = vector.load %arg5[%c0_12, %c0_13] : memref<4x1xf32, #tpu.memory_space<vmem>>, vector<4x1xf32>
    %15 = arith.addf %13, %14 : vector<4x1xf32>
    %16 = arith.negf %15 : vector<4x1xf32>
    %17 = math.exp %16 : vector<4x1xf32>
    %cst_14 = arith.constant 1.000000e+00 : f32
    %18 = vector.broadcast %cst_14 : f32 to vector<4x1xf32>
    %19 = arith.addf %18, %17 : vector<4x1xf32>
    %20 = arith.divf %18, %19 : vector<4x1xf32>
    %21 = vector.shape_cast %20 : vector<4x1xf32> to vector<1x4x1xf32>
    %22 = vector.broadcast %21 : vector<1x4x1xf32> to vector<1x4x256xf32>
    %23 = arith.mulf %0, %22 : vector<1x4x256xf32>
    %c0_15 = arith.constant 0 : index
    %c0_16 = arith.constant 0 : index
    %c0_17 = arith.constant 0 : index
    %24 = vector.load %arg6[%c0_15, %c0_16, %c0_17] : memref<1x4x256xf32, #tpu.memory_space<vmem>>, vector<1x4x256xf32>
    tpu.vector_store %arg6[%c0_15, %c0_16, %c0_17], %23 {strides = array<i32>} : memref<1x4x256xf32, #tpu.memory_space<vmem>>, vector<1x4x256xf32>,
    return
  }
  func.func @transform_0(%arg0: i32) -> (i32, i32, i32) {
    %c0_i32 = arith.constant 0 : i32
    %c0_i32_0 = arith.constant 0 : i32
    %c0_i32_1 = arith.constant 0 : i32
    return %arg0, %c0_i32, %c0_i32_0 : i32, i32, i32
  }
  func.func @transform_1(%arg0: i32) -> (i32, i32) {
    %c0_i32 = arith.constant 0 : i32
    %c0_i32_0 = arith.constant 0 : i32
    %c0_i32_1 = arith.constant 0 : i32
    return %c0_i32, %c0_i32_0 : i32, i32
  }
  func.func @transform_2(%arg0: i32) -> (i32, i32) {
    %c0_i32 = arith.constant 0 : i32
    %c0_i32_0 = arith.constant 0 : i32
    %c0_i32_1 = arith.constant 0 : i32
    return %c0_i32, %c0_i32_0 : i32, i32
  }
  func.func @transform_3(%arg0: i32) -> (i32, i32) {
    %c0_i32 = arith.constant 0 : i32
    %c0_i32_0 = arith.constant 0 : i32
    %c0_i32_1 = arith.constant 0 : i32
    return %c0_i32, %c0_i32_0 : i32, i32
  }
  func.func @transform_4(%arg0: i32) -> (i32, i32) {
    %c0_i32 = arith.constant 0 : i32
    %c0_i32_0 = arith.constant 0 : i32
    %c0_i32_1 = arith.constant 0 : i32
    return %c0_i32, %c0_i32_0 : i32, i32
  }
  func.func @transform_5(%arg0: i32) -> (i32, i32, i32) {
    %c0_i32 = arith.constant 0 : i32
    %c0_i32_0 = arith.constant 0 : i32
    %c0_i32_1 = arith.constant 0 : i32
    return %arg0, %c0_i32, %c0_i32_0 : i32, i32, i32
  }
}

</mosaic_0001>

<llo_original>
// kernel: tpu_custom_call.1
$region0: #{tpu_custom_call.1}
  #allocation0 [shape = 'u32[]', space=smem, size = 0x4, offset = 0x4, fixed_abs, tag = 'smem constant byte address 0x4 - core index']
  #allocation1 [shape = 'u32[144,128]{1,0:T(1,128)}', space=vmem, size = 0x12000, scoped, tag = 'internal scratch']
  %s0 = inlined_call_operand.vmem [shape: f32[2,4,256], index: 0, kind: input, shape index: {}]
  %s1 = inlined_call_operand.vmem [shape: f32[8,4], index: 1, kind: input, shape index: {}]
  %s2 = inlined_call_operand.vmem [shape: f32[8,1], index: 2, kind: input, shape index: {}]
  %s3 = inlined_call_operand.vmem [shape: f32[4,8], index: 3, kind: input, shape index: {}]
  %s4 = inlined_call_operand.vmem [shape: f32[4,1], index: 4, kind: input, shape index: {}]
  %s5 = inlined_call_operand.hbm [shape: f32[2,4,256], index: 5, kind: output, shape index: {}]
  %s6 = sld [smem:[#allocation0]]
  $region53: #{tpu_custom_call.1} parent=0
    _
  %s8 = ssub.s32 1, %s6
  %s9 = scalar_select 0, %s8, %s6
  $region1: #{tpu_custom_call.1} parent=0
    #allocation2 [shape = 'u8[8192]{0}', space=vmem, size = 0x2000, scoped, tag = 'output window, operand 0']
    #allocation3 [shape = 's32[2]{0}', space=sflag, size = 0x8, scoped, tag = 'scoped memory for tpu_custom_call.1']
    %10 = vsyncpa [#allocation3], 0
    %s11 = scalar_lea.sflag [#allocation3], 1
    %12 = vsyncpa %s11, 0
    loop: start=0, step=1, limit=4
    $region2: #{tpu_custom_call.1} parent=1 // loop_pre_header
      _
    $region3: #{tpu_custom_call.1} parent=1 // loop_header
      %s14 = sphi 0, %s18
      %p15 = scmp.ge.s32.totalorder %s14, 4
      %s24 = sphi 0, %s26
      %s27 = sphi 0, %s24
      %s28 = sphi 0, %s27
      %s44 = sphi 0, %s28
      %s48 = sphi 0, %s48
      %s50 = sphi 0, %s48
      %s51 = sphi 0, %s50
      %s65 = sphi 0, %s51
      %s69 = sphi 0, %s69
      %s71 = sphi 0, %s69
      %s72 = sphi 0, %s71
      %s86 = sphi 0, %s72
      %s90 = sphi 0, %s90
      %s92 = sphi 0, %s90
      %s93 = sphi 0, %s92
      %s107 = sphi 0, %s93
      %s111 = sphi 0, %s111
      %s113 = sphi 0, %s111
      %s114 = sphi 0, %s113
      %s128 = sphi 0, %s114
      %s134 = sphi 0, %s136
      %s137 = sphi 0, %s134
      %s138 = sphi 0, %s137
      %s154 = sphi 0, %s138
    $region4: #{tpu_custom_call.1} parent=1 // loop_header_branch
      %17 = sbr.rel (%p15) target = $region8
    $region5: #{tpu_custom_call.1} parent=1 // loop_body
      %s19 = ssub.s32 %s14, 1
      %s20 = ssub.s32 %s14, 2
      %s21 = sadd.s32 %s14, 1
      %s22 = ssub.s32 %s14, %s21
      %p23 = scmp.eq.s32.totalorder %s22, 0
      %s25 = sadd.s32 %s24, 1
      %s26 = scalar_select %p23, %s24, %s25
      %p29 = pneg %p23
      %p30 = scmp.eq.s32.totalorder %s14, 1
      %p31 = por %p29, %p30
      %p32 = scmp.ne.s32.totalorder %s24, %s27
      %p33 = scmp.eq.s32.totalorder %s14, 0
      %p34 = por %p32, %p33
      %p35 = scmp.ne.s32.totalorder %s24, %s27
      %p36 = scmp.eq.s32.totalorder %s19, 1
      %p37 = por %p35, %p36
      %p38 = scmp.ne.s32.totalorder %s27, %s28
      %p39 = scmp.eq.s32.totalorder %s19, 0
      %p40 = por %p38, %p39
      %p41 = scmp.ne.s32.totalorder %s27, %s28
      %p42 = scmp.eq.s32.totalorder %s20, 1
      %p43 = por %p41, %p42
      %p45 = scmp.ne.s32.totalorder %s28, %s44
      %p46 = scmp.eq.s32.totalorder %s20, 0
      %p47 = por %p45, %p46
      %s49 = sadd.s32 %s48, 1
      %p52 = scmp.eq.s32.totalorder %s14, 1
      %p53 = scmp.ne.s32.totalorder %s48, %s50
      %p54 = scmp.eq.s32.totalorder %s14, 0
      %p55 = por %p53, %p54
      %p56 = scmp.ne.s32.totalorder %s48, %s50
      %p57 = scmp.eq.s32.totalorder %s19, 1
      %p58 = por %p56, %p57
      %p59 = scmp.ne.s32.totalorder %s50, %s51
      %p60 = scmp.eq.s32.totalorder %s19, 0
      %p61 = por %p59, %p60
      %p62 = scmp.ne.s32.totalorder %s50, %s51
      %p63 = scmp.eq.s32.totalorder %s20, 1
      %p64 = por %p62, %p63
      %p66 = scmp.ne.s32.totalorder %s51, %s65
      %p67 = scmp.eq.s32.totalorder %s20, 0
      %p68 = por %p66, %p67
      %s70 = sadd.s32 %s69, 1
      %p73 = scmp.eq.s32.totalorder %s14, 1
      %p74 = scmp.ne.s32.totalorder %s69, %s71
      %p75 = scmp.eq.s32.totalorder %s14, 0
      %p76 = por %p74, %p75
      %p77 = scmp.ne.s32.totalorder %s69, %s71
      %p78 = scmp.eq.s32.totalorder %s19, 1
      %p79 = por %p77, %p78
      %p80 = scmp.ne.s32.totalorder %s71, %s72
      %p81 = scmp.eq.s32.totalorder %s19, 0
      %p82 = por %p80, %p81
      %p83 = scmp.ne.s32.totalorder %s71, %s72
      %p84 = scmp.eq.s32.totalorder %s20, 1
      %p85 = por %p83, %p84
      %p87 = scmp.ne.s32.totalorder %s72, %s86
      %p88 = scmp.eq.s32.totalorder %s20, 0
      %p89 = por %p87, %p88
      %s91 = sadd.s32 %s90, 1
      %p94 = scmp.eq.s32.totalorder %s14, 1
      %p95 = scmp.ne.s32.totalorder %s90, %s92
      %p96 = scmp.eq.s32.totalorder %s14, 0
      %p97 = por %p95, %p96
      %p98 = scmp.ne.s32.totalorder %s90, %s92
      %p99 = scmp.eq.s32.totalorder %s19, 1
      %p100 = por %p98, %p99
      %p101 = scmp.ne.s32.totalorder %s92, %s93
      %p102 = scmp.eq.s32.totalorder %s19, 0
      %p103 = por %p101, %p102
      %p104 = scmp.ne.s32.totalorder %s92, %s93
      %p105 = scmp.eq.s32.totalorder %s20, 1
      %p106 = por %p104, %p105
      %p108 = scmp.ne.s32.totalorder %s93, %s107
      %p109 = scmp.eq.s32.totalorder %s20, 0
      %p110 = por %p108, %p109
      %s112 = sadd.s32 %s111, 1
      %p115 = scmp.eq.s32.totalorder %s14, 1
      %p116 = scmp.ne.s32.totalorder %s111, %s113
      %p117 = scmp.eq.s32.totalorder %s14, 0
      %p118 = por %p116, %p117
      %p119 = scmp.ne.s32.totalorder %s111, %s113
      %p120 = scmp.eq.s32.totalorder %s19, 1
      %p121 = por %p119, %p120
      %p122 = scmp.ne.s32.totalorder %s113, %s114
      %p123 = scmp.eq.s32.totalorder %s19, 0
      %p124 = por %p122, %p123
      %p125 = scmp.ne.s32.totalorder %s113, %s114
      %p126 = scmp.eq.s32.totalorder %s20, 1
      %p127 = por %p125, %p126
      %p129 = scmp.ne.s32.totalorder %s114, %s128
      %p130 = scmp.eq.s32.totalorder %s20, 0
      %p131 = por %p129, %p130
      %s132 = ssub.s32 %s14, %s21
      %p133 = scmp.eq.s32.totalorder %s132, 0
      %s135 = sadd.s32 %s134, 1
      %s136 = scalar_select %p133, %s134, %s135
      %p139 = pneg %p133
      %p140 = scmp.eq.s32.totalorder %s14, 1
      %p141 = por %p139, %p140
      %p142 = scmp.ne.s32.totalorder %s134, %s137
      %p143 = scmp.eq.s32.totalorder %s14, 0
      %p144 = por %p142, %p143
      %p145 = scmp.ne.s32.totalorder %s134, %s137
      %p146 = scmp.eq.s32.totalorder %s19, 1
      %p147 = por %p145, %p146
      %p148 = scmp.ne.s32.totalorder %s137, %s138
      %p149 = scmp.eq.s32.totalorder %s19, 0
      %p150 = por %p148, %p149
      %p151 = scmp.ne.s32.totalorder %s137, %s138
      %p152 = scmp.eq.s32.totalorder %s20, 1
      %p153 = por %p151, %p152
      %p155 = scmp.ne.s32.totalorder %s138, %s154
      %p156 = scmp.eq.s32.totalorder %s20, 0
      %p157 = por %p155, %p156
      %p158 = scmp.le.s32.totalorder 1, %s14
      %p159 = scmp.lt.s32.totalorder %s14, 3
      %p160 = pnand %p158, %p159
      %p161 = pneg %p160
      // Predicated region
      $region9: #{tpu_custom_call.1} parent=5 // pred_check
        _
      $region10: #{tpu_custom_call.1} parent=5 // pred_check_branch
        %163 = sbr.rel (%p160) target = $region12
      $region11: #{tpu_custom_call.1} parent=5 // pred_region
        %s164 = ssub.s32 %s14, 1
        // Predicated region
        $region13: #{tpu_custom_call.1} parent=11 // pred_check
          %p165 = pneg %p61
        $region14: #{tpu_custom_call.1} parent=11 // pred_check_branch
          %167 = sbr.rel (%p165) target = $region16
        $region15: #{tpu_custom_call.1} parent=11 // pred_region
          _
        $region16: #{tpu_custom_call.1} parent=11 // pred_fallthru
          _
        // Predicated region
        $region17: #{tpu_custom_call.1} parent=11 // pred_check
          %p168 = pneg %p82
        $region18: #{tpu_custom_call.1} parent=11 // pred_check_branch
          %170 = sbr.rel (%p168) target = $region20
        $region19: #{tpu_custom_call.1} parent=11 // pred_region
          _
        $region20: #{tpu_custom_call.1} parent=11 // pred_fallthru
          _
        // Predicated region
        $region21: #{tpu_custom_call.1} parent=11 // pred_check
          %p171 = pneg %p103
        $region22: #{tpu_custom_call.1} parent=11 // pred_check_branch
          %173 = sbr.rel (%p171) target = $region24
        $region23: #{tpu_custom_call.1} parent=11 // pred_region
          _
        $region24: #{tpu_custom_call.1} parent=11 // pred_fallthru
          _
        // Predicated region
        $region25: #{tpu_custom_call.1} parent=11 // pred_check
          %p174 = pneg %p124
        $region26: #{tpu_custom_call.1} parent=11 // pred_check_branch
          %176 = sbr.rel (%p174) target = $region28
        $region27: #{tpu_custom_call.1} parent=11 // pred_region
          _
        $region28: #{tpu_custom_call.1} parent=11 // pred_fallthru
          _
      $region12: #{tpu_custom_call.1} parent=5 // pred_fallthru
        _
      %p177 = scmp.lt.s32.totalorder %s14, 2
      // Predicated region
      $region29: #{tpu_custom_call.1} parent=5 // pred_check
        %p178 = pneg %p177
      $region30: #{tpu_custom_call.1} parent=5 // pred_check_branch
        %180 = sbr.rel (%p178) target = $region32
      $region31: #{tpu_custom_call.1} parent=5 // pred_region
        // Predicated region
        $region33: #{tpu_custom_call.1} parent=31 // pred_check
          %p181 = pneg %p34
        $region34: #{tpu_custom_call.1} parent=31 // pred_check_branch
          %183 = sbr.rel (%p181) target = $region36
        $region35: #{tpu_custom_call.1} parent=31 // pred_region
          %p184 = scmp.lt.s32.totalorder %s14, 1
          %s185 = scalar_select %p184, %s14, 1
          %s186 = smul.addr %s185, 2
          %s187 = smul.addr %s186, 4
          %s188 = scalar_lea.vmem %s0, %s187
        $region36: #{tpu_custom_call.1} parent=31 // pred_fallthru
          _
      $region32: #{tpu_custom_call.1} parent=5 // pred_fallthru
        _
      %p189 = scmp.le.s32.totalorder 1, %s14
      %p190 = scmp.lt.s32.totalorder %s14, 3
      %p191 = pnand %p189, %p190
      %p192 = pneg %p191
      // Predicated region
      $region37: #{tpu_custom_call.1} parent=5 // pred_check
        _
      $region38: #{tpu_custom_call.1} parent=5 // pred_check_branch
        %194 = sbr.rel (%p191) target = $region40
      $region39: #{tpu_custom_call.1} parent=5 // pred_region
        %s195 = ssub.s32 %s14, 1
        %p196 = scmp.lt.s32.totalorder %s19, 1
        %s197 = scalar_select %p196, %s19, 1
        %s198 = smul.addr %s197, 2
        %s199 = smul.addr %s198, 4
        %s200 = scalar_lea.vmem %s0, %s199
        %p201 = pneg %p40
        %p202 = pneg %p37
        %p203 = pneg %p61
        %p204 = pneg %p58
        %p205 = pneg %p82
        %p206 = pneg %p79
        %p207 = pneg %p103
        %p208 = pneg %p100
        %p209 = pneg %p124
        %p210 = pneg %p121
        %p211 = pneg %p150
        %p212 = pneg %p147
        %s213 = sand.u32 %s137, 1
        %s214 = scalar_lea.sflag [#allocation3], %s213
        %s215 = sand.u32 %s137, 1
        %s216 = smul.addr %s215, 8
        %s217 = scalar_lea.vmem [#allocation2], %s216
        %p218 = scmp.lt.s32.totalorder %s19, 1
        %s219 = scalar_select %p218, %s19, 1
        %s220 = smul.addr %s219, 2
        %s221 = smul.addr %s220, 4
        %s222 = scalar_lea.vmem %s0, %s221
        %v223 = vld [vmem:[%s222] sm:$0xff]
        %v225 = vcombine.high %v223, %v223
        %vm227 = vcmask 1043456
        %v228 = vsel %vm227, %v223, 0.0
        %v229 = vsel %vm227, %v225, 0.0
        %v230 = vadd.f32 %v228, %v229
        %231 = vadd.xlane.f32.xlu0 %v230
        %v232 = vpop.xlane.xlu0 %231
        %v233 = vmul.f32 %v232, 0.00390625
        %v234 = vld [vmem:[%s1] sm:$0xff]
        %v235 = vld [vmem:[%s2] sm:$0xff]
        %vm236 = vcmask 31744
        %v238 = vsel %vm236, %v234, 0
        %v241 = vsel %vm227, %v233, 0
        %243 = vmatprep.subr.mxu0 0.0
        %244 = vmatpush1.msra.mxu0 %v241
        %245 = vmatprep.subr.mxu0 0.0
        %246 = vmatpush1.msra.mxu0 0.0
        %247 = vmatprep.subr.mxu0 0.0
        %248 = vmatpush1.msra.mxu0 0.0
        %249 = vmatprep.subr.mxu0 0.0
        %250 = vmatpush1.msra.mxu0 0.0
        %251 = vmatprep.subr.mxu0 0.0
        %252 = vmatpush1.msra.mxu0 0.0
        %253 = vmatprep.subr.mxu0 0.0
        %254 = vmatpush1.msra.mxu0 0.0
        %255 = vmatprep.subr.mxu0 0.0
        %256 = vmatpush1.msra.mxu0 0.0
        %257 = vmatprep.subr.mxu0 0.0
        %258 = vmatpush1.msra.mxu0 0.0
        %259 = vmatprep.subr.mxu0 0.0
        %260 = vmatpush1.msra.mxu0 0.0
        %261 = vmatprep.subr.mxu0 0.0
        %262 = vmatpush1.msra.mxu0 0.0
        %263 = vmatprep.subr.mxu0 0.0
        %264 = vmatpush1.msra.mxu0 0.0
        %265 = vmatprep.subr.mxu0 0.0
        %266 = vmatpush1.msra.mxu0 0.0
        %267 = vmatprep.subr.mxu0 0.0
        %268 = vmatpush1.msra.mxu0 0.0
        %269 = vmatprep.subr.mxu0 0.0
        %270 = vmatpush1.msra.mxu0 0.0
        %271 = vmatprep.subr.mxu0 0.0
        %272 = vmatpush1.msra.mxu0 0.0
        %273 = vmatprep.subr.mxu0 0.0
        %274 = vmatpush1.msra.mxu0 0.0
        %275 = vmatprep.subr.mxu0 0.0
        %276 = vmatpush1.msra.mxu0 0.0
        %277 = vmatprep.subr.mxu0 0.0
        %278 = vmatpush1.msra.mxu0 0.0
        %279 = vmatprep.subr.mxu0 0.0
        %280 = vmatpush1.msra.mxu0 0.0
        %281 = vmatprep.subr.mxu0 0.0
        %282 = vmatpush1.msra.mxu0 0.0
        %283 = vmatprep.subr.mxu0 0.0
        %284 = vmatpush1.msra.mxu0 0.0
        %285 = vmatprep.subr.mxu0 0.0
        %286 = vmatpush1.msra.mxu0 0.0
        %287 = vmatprep.subr.mxu0 0.0
        %288 = vmatpush1.msra.mxu0 0.0
        %289 = vmatprep.subr.mxu0 0.0
        %290 = vmatpush1.msra.mxu0 0.0
        %291 = vmatprep.subr.mxu0 0.0
        %292 = vmatpush1.msra.mxu0 0.0
        %293 = vmatprep.subr.mxu0 0.0
        %294 = vmatpush1.msra.mxu0 0.0
        %295 = vmatprep.subr.mxu0 0.0
        %296 = vmatpush1.msra.mxu0 0.0
        %297 = vmatprep.subr.mxu0 0.0
        %298 = vmatpush1.msra.mxu0 0.0
        %299 = vmatprep.subr.mxu0 0.0
        %300 = vmatpush1.msra.mxu0 0.0
        %301 = vmatprep.subr.mxu0 0.0
        %302 = vmatpush1.msra.mxu0 0.0
        %303 = vmatprep.subr.mxu0 0.0
        %304 = vmatpush1.msra.mxu0 0.0
        %305 = vmatprep.subr.mxu0 0.0
        %306 = vmatpush1.msra.mxu0 0.0
        %307 = vmatprep.mubr.f32.mxu0 0.0
        %308 = vmatmul.mubr.f32.gmra.mrb[0].mxu0 %v238
        %v309 = vpop.f32.mrb[0].mxu0
        %v310 = vadd.f32 %v235, %v309
        %v311 = vpop.f32.mrb[0].mxu0
        %312 = vdwg.mxu0
        %v313 = vmax.f32 %v310, 0.0
        %v314 = vld [vmem:[%s3] sm:$0xf]
        %v315 = vld [vmem:[%s4] sm:$0xf]
        %vm316 = vcmask 64512
        %v318 = vsel %vm316, %v314, 0
        %320 = vmatprep.subr.mxu0 0.0
        %321 = vmatpush1.msra.mxu0 %v313
        %322 = vmatprep.subr.mxu0 0.0
        %323 = vmatpush1.msra.mxu0 0.0
        %324 = vmatprep.subr.mxu0 0.0
        %325 = vmatpush1.msra.mxu0 0.0
        %326 = vmatprep.subr.mxu0 0.0
        %327 = vmatpush1.msra.mxu0 0.0
        %328 = vmatprep.subr.mxu0 0.0
        %329 = vmatpush1.msra.mxu0 0.0
        %330 = vmatprep.subr.mxu0 0.0
        %331 = vmatpush1.msra.mxu0 0.0
        %332 = vmatprep.subr.mxu0 0.0
        %333 = vmatpush1.msra.mxu0 0.0
        %334 = vmatprep.subr.mxu0 0.0
        %335 = vmatpush1.msra.mxu0 0.0
        %336 = vmatprep.subr.mxu0 0.0
        %337 = vmatpush1.msra.mxu0 0.0
        %338 = vmatprep.subr.mxu0 0.0
        %339 = vmatpush1.msra.mxu0 0.0
        %340 = vmatprep.subr.mxu0 0.0
        %341 = vmatpush1.msra.mxu0 0.0
        %342 = vmatprep.subr.mxu0 0.0
        %343 = vmatpush1.msra.mxu0 0.0
        %344 = vmatprep.subr.mxu0 0.0
        %345 = vmatpush1.msra.mxu0 0.0
        %346 = vmatprep.subr.mxu0 0.0
        %347 = vmatpush1.msra.mxu0 0.0
        %348 = vmatprep.subr.mxu0 0.0
        %349 = vmatpush1.msra.mxu0 0.0
        %350 = vmatprep.subr.mxu0 0.0
        %351 = vmatpush1.msra.mxu0 0.0
        %352 = vmatprep.subr.mxu0 0.0
        %353 = vmatpush1.msra.mxu0 0.0
        %354 = vmatprep.subr.mxu0 0.0
        %355 = vmatpush1.msra.mxu0 0.0
        %356 = vmatprep.subr.mxu0 0.0
        %357 = vmatpush1.msra.mxu0 0.0
        %358 = vmatprep.subr.mxu0 0.0
        %359 = vmatpush1.msra.mxu0 0.0
        %360 = vmatprep.subr.mxu0 0.0
        %361 = vmatpush1.msra.mxu0 0.0
        %362 = vmatprep.subr.mxu0 0.0
        %363 = vmatpush1.msra.mxu0 0.0
        %364 = vmatprep.subr.mxu0 0.0
        %365 = vmatpush1.msra.mxu0 0.0
        %366 = vmatprep.subr.mxu0 0.0
        %367 = vmatpush1.msra.mxu0 0.0
        %368 = vmatprep.subr.mxu0 0.0
        %369 = vmatpush1.msra.mxu0 0.0
        %370 = vmatprep.subr.mxu0 0.0
        %371 = vmatpush1.msra.mxu0 0.0
        %372 = vmatprep.subr.mxu0 0.0
        %373 = vmatpush1.msra.mxu0 0.0
        %374 = vmatprep.subr.mxu0 0.0
        %375 = vmatpush1.msra.mxu0 0.0
        %376 = vmatprep.subr.mxu0 0.0
        %377 = vmatpush1.msra.mxu0 0.0
        %378 = vmatprep.subr.mxu0 0.0
        %379 = vmatpush1.msra.mxu0 0.0
        %380 = vmatprep.subr.mxu0 0.0
        %381 = vmatpush1.msra.mxu0 0.0
        %382 = vmatprep.subr.mxu0 0.0
        %383 = vmatpush1.msra.mxu0 0.0
        %384 = vmatprep.mubr.f32.mxu0 0.0
        %385 = vmatmul.mubr.f32.gmra.mrb[0].mxu0 %v318
        %v386 = vpop.f32.mrb[0].mxu0
        %v387 = vadd.f32 %v315, %v386
        %v388 = vpop.f32.mrb[0].mxu0
        %389 = vdwg.mxu0
        %v390 = vxor.u32 %v387, 2147483648
        %v391 = vmul.f32 %v390, 1.442695
        %v392 = vpow.pop %v391
        %v393 = vadd.f32 %v392, 1.0
        %v394 = vrcp.pop %v393
        %v395 = vmul.f32 1.0, %v394
        %397 = vset.pattern.permute.xlu0 0
        %398 = vperm.xlu0 %397, %v395
        %v399 = vpop.permute.xlu0 %398
        %v401 = vunpack.c.l.s4 839922192
        %v402 = vunpack.c.0.s8 %v401
        %v403 = vlaneseq
        %v404 = vshrl.u32 %v403, 7
        %v405 = vsub.s32 %v402, %v404
        %v406 = vrot.slane %v399, %v405
        %v408 = vmul.f32 %v223, %v406
        %409 = vst [vmem:[%s217] sm:$0xff] %v408
        %s410 = sand.u32 %s137, 1
        %s411 = scalar_lea.sflag [#allocation3], %s410
        %s412 = sand.u32 %s137, 1
        %s413 = smul.addr %s412, 8
        %s414 = scalar_lea.vmem [#allocation2], %s413
        // Predicated region
        $region41: #{tpu_custom_call.1} parent=39 // pred_check
          %p415 = pneg %p147
        $region42: #{tpu_custom_call.1} parent=39 // pred_check_branch
          %417 = sbr.rel (%p415) target = $region44
        $region43: #{tpu_custom_call.1} parent=39 // pred_region
          %s419 = ssub.s32 128, 128
          %420 = vsyncadd %s411, %s419
          %s421 = smul.addr %s19, 2
          %s422 = smul.addr %s421, 64
          %s423 = scalar_lea.hbm %s5, %s422
          %s425 = sshll.u32 %s414, 4
          %s426 = int_to_ptr.vmem [resolvable:$true] %s425
          %428 = dma.vmem_to_hbm [thread:$0]  %s426, 128, %s423, %s411
        $region44: #{tpu_custom_call.1} parent=39 // pred_fallthru
          _
      $region40: #{tpu_custom_call.1} parent=5 // pred_fallthru
        _
      %p429 = scmp.le.s32.totalorder 2, %s14
      // Predicated region
      $region45: #{tpu_custom_call.1} parent=5 // pred_check
        %p430 = pneg %p429
      $region46: #{tpu_custom_call.1} parent=5 // pred_check_branch
        %432 = sbr.rel (%p430) target = $region48
      $region47: #{tpu_custom_call.1} parent=5 // pred_region
        %s433 = ssub.s32 %s14, 2
        // Predicated region
        $region49: #{tpu_custom_call.1} parent=47 // pred_check
          %p434 = pneg %p153
        $region50: #{tpu_custom_call.1} parent=47 // pred_check_branch
          %436 = sbr.rel (%p434) target = $region52
        $region51: #{tpu_custom_call.1} parent=47 // pred_region
          %s437 = sand.u32 %s138, 1
          %s438 = scalar_lea.sflag [#allocation3], %s437
          %s439 = sand.u32 %s138, 1
          %s440 = smul.addr %s439, 8
          %s441 = scalar_lea.vmem [#allocation2], %s440
          %442 = dma.done %s438, 128
        $region52: #{tpu_custom_call.1} parent=47 // pred_fallthru
          _
      $region48: #{tpu_custom_call.1} parent=5 // pred_fallthru
        _
    $region6: #{tpu_custom_call.1} parent=1 // loop_footer
      %s18 = sadd.s32 1, %s14
    $region7: #{tpu_custom_call.1} parent=1 // loop_footer_branch
      %13 = sbr.rel target = $region3
    $region8: #{tpu_custom_call.1} parent=1 // loop_exit
      _
    %443 = vsyncpa [#allocation3], 1
    %s444 = scalar_lea.sflag [#allocation3], 1
    %445 = vsyncpa %s444, 1

</llo_original>
